<compile_context>
chip_gen: v7x
topology: tpu7x:2x2x1
jax: 0.10.0
libtpu: 0.0.40
codegen_flags: <defaults>
</compile_context>

<pallas_src>
import functools

import jax
import jax.numpy as jnp
from jax.experimental import pallas as pl
from jax.experimental.pallas import tpu as pltpu

_SUBLANE = 8  # batch tile must be a multiple of this (or equal to full B)


def _round_up(x, m):
    return ((x + m - 1) // m) * m


def _vmem_budget_bytes():
    """Generation-aware VMEM ceiling (leave headroom below physical VMEM)."""
    phys = 64 << 20  # v7x worst case if we cannot query the device
    try:
        info = pltpu.get_tpu_info()
        phys = int(getattr(info, "vmem_capacity_bytes", phys))
    except Exception:
        pass
    # v7x (64 MiB) -> 48 MiB cap; v5e/v6e (128 MiB) -> 100 MiB cap.
    return int(max(min(phys - (16 << 20), 100 << 20), 16 << 20))


def _choose_tb(B, dims, tile_budget_bytes):
    """Pick the batch tile: big enough to amortize per-step overhead, small
    enough to fit VMEM, and yielding >= 2 tiles so both v7x TCs get work."""
    if B <= _SUBLANE:
        return B  # full-dim block; legal even when < 8 rows
    d_in, d_out, d_max = dims[0], dims[-1], max(dims)
    # Per batch row: double-buffered x/out tiles + headroom for spilled
    # live activations inside the fused body.
    per_row = (2 * d_in + 2 * d_out + 2 * d_max) * 4
    cap_rows = max(_SUBLANE, tile_budget_bytes // max(per_row, 1))
    tb = min(512, cap_rows, _round_up(B, _SUBLANE))
    tb = max(_SUBLANE, (tb // _SUBLANE) * _SUBLANE)
    # Megacore: keep at least 2 tiles on the parallel batch axis when possible.
    if B > _SUBLANE and pl.cdiv(B, tb) < 2:
        tb = max(_SUBLANE, _round_up(pl.cdiv(B, 2), _SUBLANE))
    return tb


def _fused_mlp_kernel(*refs, n_layers, compute_dtype):
    """refs = (x, w0, b0, w1, b1, ..., w_{L-1}, b_{L-1}, out).

    Runs the whole MLP for one batch tile. Each layer is one MXU matmul with
    f32 accumulation, f32 bias add, and ReLU on every layer except the last.
    The running activation stays in vregs/VMEM — no HBM traffic between layers.
    """
    x_ref = refs[0]
    o_ref = refs[1 + 2 * n_layers]

    h = x_ref[...]  # (TB, D0) f32
    for li in range(n_layers):
        w = refs[1 + 2 * li][...]
        b = refs[2 + 2 * li][...]
        y = jnp.dot(h.astype(compute_dtype), w.astype(compute_dtype),
                    preferred_element_type=jnp.float32)
        y = y + b                       # (1, Dout) f32 broadcasts over rows
        if li < n_layers - 1:
            y = jnp.maximum(y, 0.0)     # ReLU on hidden layers only
        h = y
    o_ref[...] = h.astype(o_ref.dtype)


@functools.partial(jax.jit, static_argnames=("use_bf16", "single_buffer_weights"))
def encoder_forward(x, params, *, use_bf16=True, single_buffer_weights=True):
    """Encoder forward: seq of [Linear, ReLU] then final Linear (no ReLU).

    x:      (B, data_dim) float32
    params: list of (w, b) with w: (Din, Dout), b: (1, Dout), all float32
    """
    B, data_dim = x.shape
    n_layers = len(params)
    dims = [data_dim] + [w.shape[1] for (w, _) in params]

    compute_dtype = jnp.bfloat16 if use_bf16 else jnp.float32
    w_dtype = jnp.bfloat16 if use_bf16 else jnp.float32
    w_itemsize = 2 if use_bf16 else 4

    # Resident parameter bytes (weights + biases live in VMEM across the grid).
    w_buffers = 1 if single_buffer_weights else 2
    resident = w_buffers * sum(
        dims[l] * dims[l + 1] * w_itemsize + dims[l + 1] * 4
        for l in range(n_layers))

    vmem_cap = _vmem_budget_bytes()
    tile_budget = max(vmem_cap - resident - (2 << 20), 4 << 20)
    tb = _choose_tb(B, dims, tile_budget)
    grid = (pl.cdiv(B, tb),)  # edge clipping handles a partial last tile

    wb_kwargs = {"pipeline_mode": pl.Buffered(1)} if single_buffer_weights else {}

    # x keeps its true shape: last dim == full array dim (legal even if <128),
    # batch tiled with edge clipping -> no pad copies in HBM.
    flat_inputs = [x]
    in_specs = [pl.BlockSpec((tb, data_dim), lambda i: (i, 0))]
    for l, (w, b) in enumerate(params):
        flat_inputs += [w.astype(w_dtype), b.reshape(1, -1).astype(jnp.float32)]
        in_specs += [
            pl.BlockSpec((dims[l], dims[l + 1]), lambda i: (0, 0), **wb_kwargs),
            pl.BlockSpec((1, dims[l + 1]), lambda i: (0, 0), **wb_kwargs),
        ]

    # Output at its true width: no lane padding, no post-kernel slice.
    out_spec = pl.BlockSpec((tb, dims[-1]), lambda i: (i, 0))
    out_shape = jax.ShapeDtypeStruct((B, dims[-1]), jnp.float32)

    # Advisory cost estimate for XLA's scheduler (true, unpadded sizes).
    flops = sum(2 * B * dims[l] * dims[l + 1] for l in range(n_layers))
    bytes_accessed = (
        B * data_dim * 4
        + sum(dims[l] * dims[l + 1] * w_itemsize + dims[l + 1] * 4
              for l in range(n_layers))
        + B * dims[-1] * 4
    )
    cost = pl.CostEstimate(flops=flops, transcendentals=0,
                           bytes_accessed=bytes_accessed)

    # VMEM budget: resident params + double-buffered x/out tiles + spill
    # headroom for the live activation chain, clamped to the generation cap.
    d_max = max(dims)
    io_tiles = tb * (2 * data_dim + 2 * dims[-1]) * 4
    spill = 2 * tb * d_max * 4
    vmem_limit = int(min(max(resident + io_tiles + spill + (2 << 20), 4 << 20),
                         vmem_cap))

    kernel = functools.partial(_fused_mlp_kernel,
                               n_layers=n_layers,
                               compute_dtype=compute_dtype)

    return pl.pallas_call(
        kernel,
        out_shape=out_shape,
        grid=grid,
        in_specs=in_specs,
        out_specs=out_spec,
        compiler_params=pltpu.CompilerParams(
            dimension_semantics=("parallel",),
            vmem_limit_bytes=vmem_limit,
        ),
        cost_estimate=cost,
    )(*flat_inputs)


def init_encoder_params(key, data_dim, compress_dims, embedding_dim):
    """Deterministic init matching torch.nn.Linear defaults.

    Returns list of (w, b) with w: (Din, Dout), b: (1, Dout), float32.
    """
    params = []
    dim = data_dim
    dims_out = list(compress_dims) + [embedding_dim]
    for d_out in dims_out:
        key, kw, kb = jax.random.split(key, 3)
        bound = 1.0 / jnp.sqrt(jnp.asarray(dim, jnp.float32))
        w = jax.random.uniform(kw, (dim, d_out), jnp.float32, -bound, bound)
        b = jax.random.uniform(kb, (1, d_out), jnp.float32, -bound, bound)
        params.append((w, b))
        dim = d_out
    return params


def _reference_forward(x, params):
    h = x
    for li, (w, b) in enumerate(params):
        h = h @ w + b
        if li != len(params) - 1:
            h = jnp.maximum(h, 0.0)
    return h


if __name__ == "__main__":
    data_dim = 32
    compress_dims = (64, 32)
    embedding_dim = 16

    key = jax.random.PRNGKey(0)
    key, kx1, kx2 = jax.random.split(key, 3)
    params = init_encoder_params(key, data_dim, compress_dims, embedding_dim)

    x_small = jax.random.normal(kx1, (8, data_dim), jnp.float32)

    # Probe whether this jax build accepts single-buffered (pl.Buffered(1))
    # constant weight blocks; if not, fall back to default double-buffering.
    try:
        jax.block_until_ready(
            encoder_forward(x_small, params, use_bf16=False,
                            single_buffer_weights=True))
        single_buf = True
    except Exception:
        single_buf = False

    fwd = functools.partial(encoder_forward, single_buffer_weights=single_buf)

    # 1) Small batch (single tile), f32 MXU path — strict check.
    mu = jax.block_until_ready(fwd(x_small, params, use_bf16=False))
    ref = _reference_forward(x_small, params)
    assert mu.shape == (8, embedding_dim)
    assert jnp.allclose(mu, ref, atol=1e-4), "f32 mismatch vs reference"

    # 2) Non-aligned larger batch -> 2 batch tiles (cdiv + edge clipping), f32.
    x_big = jax.random.normal(kx2, (300, data_dim), jnp.float32)
    mu_big = jax.block_until_ready(fwd(x_big, params, use_bf16=False))
    ref_big = _reference_forward(x_big, params)
    assert mu_big.shape == (300, embedding_dim)
    assert jnp.allclose(mu_big, ref_big, atol=1e-4), "tiled f32 mismatch vs reference"

    # 3) Default bf16 MXU-operand path (f32 accumulate) — looser tolerance.
    mu_bf16 = jax.block_until_ready(fwd(x_big, params))
    assert jnp.allclose(mu_bf16, ref_big, rtol=3e-2, atol=1e-1), \
        "bf16 mismatch vs reference"

    print("KERNEL_OK")
</pallas_src>

<mosaic_0001>
module attributes {stable_mosaic.version = 11 : i64} {
  func.func @_fused_mlp_kernel(%arg0: i32, %arg1: memref<8x32xf32, #tpu.memory_space<vmem>>, %arg2: memref<32x64xf32, #tpu.memory_space<vmem>>, %arg3: memref<1x64xf32, #tpu.memory_space<vmem>>, %arg4: memref<64x32xf32, #tpu.memory_space<vmem>>, %arg5: memref<1x32xf32, #tpu.memory_space<vmem>>, %arg6: memref<32x16xf32, #tpu.memory_space<vmem>>, %arg7: memref<1x16xf32, #tpu.memory_space<vmem>>, %arg8: memref<8x16xf32, #tpu.memory_space<vmem>>) attributes {dimension_semantics = [#tpu.dimension_semantics<parallel>], iteration_bounds = array<i64: 1>, scalar_prefetch = 0 : i64, scratch_operands = 0 : i64, tpu.core_type = #tpu.core_type<tc>, window_params = [{transform_indices = @transform_0, window_bounds = array<i64: 8, 32>}, {pipeline_mode = #tpu.pipeline_mode<synchronous>, transform_indices = @transform_1, window_bounds = array<i64: 32, 64>}, {pipeline_mode = #tpu.pipeline_mode<synchronous>, transform_indices = @transform_2, window_bounds = array<i64: 1, 64>}, {pipeline_mode = #tpu.pipeline_mode<synchronous>, transform_indices = @transform_3, window_bounds = array<i64: 64, 32>}, {pipeline_mode = #tpu.pipeline_mode<synchronous>, transform_indices = @transform_4, window_bounds = array<i64: 1, 32>}, {pipeline_mode = #tpu.pipeline_mode<synchronous>, transform_indices = @transform_5, window_bounds = array<i64: 32, 16>}, {pipeline_mode = #tpu.pipeline_mode<synchronous>, transform_indices = @transform_6, window_bounds = array<i64: 1, 16>}, {transform_indices = @transform_7, window_bounds = array<i64: 8, 16>}]} {
    %c0 = arith.constant 0 : index
    %c0_0 = arith.constant 0 : index
    %0 = vector.load %arg1[%c0, %c0_0] : memref<8x32xf32, #tpu.memory_space<vmem>>, vector<8x32xf32>
    %c0_1 = arith.constant 0 : index
    %c0_2 = arith.constant 0 : index
    %1 = vector.load %arg2[%c0_1, %c0_2] : memref<32x64xf32, #tpu.memory_space<vmem>>, vector<32x64xf32>
    %c0_3 = arith.constant 0 : index
    %c0_4 = arith.constant 0 : index
    %2 = vector.load %arg3[%c0_3, %c0_4] : memref<1x64xf32, #tpu.memory_space<vmem>>, vector<1x64xf32>
    %cst = arith.constant dense<0.000000e+00> : vector<8x64xf32>
    %3 = tpu.matmul %0, %1, %cst {dimension_numbers = #tpu.dot_dimension_numbers<[1], [0], [0], [1], [0, 0, 1, 1], [], []>} : vector<8x32xf32>, vector<32x64xf32>, vector<8x64xf32> -> vector<8x64xf32>
    %4 = vector.broadcast %2 : vector<1x64xf32> to vector<8x64xf32>
    %5 = arith.addf %3, %4 : vector<8x64xf32>
    %cst_5 = arith.constant 0.000000e+00 : f32
    %6 = vector.broadcast %cst_5 : f32 to vector<8x64xf32>
    %7 = arith.maximumf %5, %6 : vector<8x64xf32>
    %c0_6 = arith.constant 0 : index
    %c0_7 = arith.constant 0 : index
    %8 = vector.load %arg4[%c0_6, %c0_7] : memref<64x32xf32, #tpu.memory_space<vmem>>, vector<64x32xf32>
    %c0_8 = arith.constant 0 : index
    %c0_9 = arith.constant 0 : index
    %9 = vector.load %arg5[%c0_8, %c0_9] : memref<1x32xf32, #tpu.memory_space<vmem>>, vector<1x32xf32>
    %cst_10 = arith.constant dense<0.000000e+00> : vector<8x32xf32>
    %10 = tpu.matmul %7, %8, %cst_10 {dimension_numbers = #tpu.dot_dimension_numbers<[1], [0], [0], [1], [0, 0, 1, 1], [], []>} : vector<8x64xf32>, vector<64x32xf32>, vector<8x32xf32> -> vector<8x32xf32>
    %11 = vector.broadcast %9 : vector<1x32xf32> to vector<8x32xf32>
    %12 = arith.addf %10, %11 : vector<8x32xf32>
    %cst_11 = arith.constant 0.000000e+00 : f32
    %13 = vector.broadcast %cst_11 : f32 to vector<8x32xf32>
    %14 = arith.maximumf %12, %13 : vector<8x32xf32>
    %c0_12 = arith.constant 0 : index
    %c0_13 = arith.constant 0 : index
    %15 = vector.load %arg6[%c0_12, %c0_13] : memref<32x16xf32, #tpu.memory_space<vmem>>, vector<32x16xf32>
    %c0_14 = arith.constant 0 : index
    %c0_15 = arith.constant 0 : index
    %16 = vector.load %arg7[%c0_14, %c0_15] : memref<1x16xf32, #tpu.memory_space<vmem>>, vector<1x16xf32>
    %cst_16 = arith.constant dense<0.000000e+00> : vector<8x16xf32>
    %17 = tpu.matmul %14, %15, %cst_16 {dimension_numbers = #tpu.dot_dimension_numbers<[1], [0], [0], [1], [0, 0, 1, 1], [], []>} : vector<8x32xf32>, vector<32x16xf32>, vector<8x16xf32> -> vector<8x16xf32>
    %18 = vector.broadcast %16 : vector<1x16xf32> to vector<8x16xf32>
    %19 = arith.addf %17, %18 : vector<8x16xf32>
    %c0_17 = arith.constant 0 : index
    %c0_18 = arith.constant 0 : index
    %20 = vector.load %arg8[%c0_17, %c0_18] : memref<8x16xf32, #tpu.memory_space<vmem>>, vector<8x16xf32>
    tpu.vector_store %arg8[%c0_17, %c0_18], %19 {strides = array<i32>} : memref<8x16xf32, #tpu.memory_space<vmem>>, vector<8x16xf32>,
    return
  }
  func.func @transform_0(%arg0: i32) -> (i32, i32) {
    %c0_i32 = arith.constant 0 : i32
    %c0_i32_0 = arith.constant 0 : i32
    return %arg0, %c0_i32 : i32, i32
  }
  func.func @transform_1(%arg0: i32) -> (i32, i32) {
    %c0_i32 = arith.constant 0 : i32
    %c0_i32_0 = arith.constant 0 : i32
    %c0_i32_1 = arith.constant 0 : i32
    return %c0_i32, %c0_i32_0 : i32, i32
  }
  func.func @transform_2(%arg0: i32) -> (i32, i32) {
    %c0_i32 = arith.constant 0 : i32
    %c0_i32_0 = arith.constant 0 : i32
    %c0_i32_1 = arith.constant 0 : i32
    return %c0_i32, %c0_i32_0 : i32, i32
  }
  func.func @transform_3(%arg0: i32) -> (i32, i32) {
    %c0_i32 = arith.constant 0 : i32
    %c0_i32_0 = arith.constant 0 : i32
    %c0_i32_1 = arith.constant 0 : i32
    return %c0_i32, %c0_i32_0 : i32, i32
  }
  func.func @transform_4(%arg0: i32) -> (i32, i32) {
    %c0_i32 = arith.constant 0 : i32
    %c0_i32_0 = arith.constant 0 : i32
    %c0_i32_1 = arith.constant 0 : i32
    return %c0_i32, %c0_i32_0 : i32, i32
  }
  func.func @transform_5(%arg0: i32) -> (i32, i32) {
    %c0_i32 = arith.constant 0 : i32
    %c0_i32_0 = arith.constant 0 : i32
    %c0_i32_1 = arith.constant 0 : i32
    return %c0_i32, %c0_i32_0 : i32, i32
  }
  func.func @transform_6(%arg0: i32) -> (i32, i32) {
    %c0_i32 = arith.constant 0 : i32
    %c0_i32_0 = arith.constant 0 : i32
    %c0_i32_1 = arith.constant 0 : i32
    return %c0_i32, %c0_i32_0 : i32, i32
  }
  func.func @transform_7(%arg0: i32) -> (i32, i32) {
    %c0_i32 = arith.constant 0 : i32
    %c0_i32_0 = arith.constant 0 : i32
    return %arg0, %c0_i32 : i32, i32
  }
}

module attributes {stable_mosaic.version = 11 : i64} {
  func.func @_fused_mlp_kernel(%arg0: i32, %arg1: memref<8x32xf32, #tpu.memory_space<vmem>>, %arg2: memref<32x64xf32, #tpu.memory_space<vmem>>, %arg3: memref<1x64xf32, #tpu.memory_space<vmem>>, %arg4: memref<64x32xf32, #tpu.memory_space<vmem>>, %arg5: memref<1x32xf32, #tpu.memory_space<vmem>>, %arg6: memref<32x16xf32, #tpu.memory_space<vmem>>, %arg7: memref<1x16xf32, #tpu.memory_space<vmem>>, %arg8: memref<8x16xf32, #tpu.memory_space<vmem>>) attributes {dimension_semantics = [#tpu.dimension_semantics<parallel>], iteration_bounds = array<i64: 1>, scalar_prefetch = 0 : i64, scratch_operands = 0 : i64, tpu.core_type = #tpu.core_type<tc>, window_params = [{transform_indices = @transform_0, window_bounds = array<i64: 8, 32>}, {pipeline_mode = #tpu.pipeline_mode<synchronous>, transform_indices = @transform_1, window_bounds = array<i64: 32, 64>}, {pipeline_mode = #tpu.pipeline_mode<synchronous>, transform_indices = @transform_2, window_bounds = array<i64: 1, 64>}, {pipeline_mode = #tpu.pipeline_mode<synchronous>, transform_indices = @transform_3, window_bounds = array<i64: 64, 32>}, {pipeline_mode = #tpu.pipeline_mode<synchronous>, transform_indices = @transform_4, window_bounds = array<i64: 1, 32>}, {pipeline_mode = #tpu.pipeline_mode<synchronous>, transform_indices = @transform_5, window_bounds = array<i64: 32, 16>}, {pipeline_mode = #tpu.pipeline_mode<synchronous>, transform_indices = @transform_6, window_bounds = array<i64: 1, 16>}, {transform_indices = @transform_7, window_bounds = array<i64: 8, 16>}]} {
    %c0 = arith.constant 0 : index
    %c0_0 = arith.constant 0 : index
    %0 = vector.load %arg1[%c0, %c0_0] : memref<8x32xf32, #tpu.memory_space<vmem>>, vector<8x32xf32>
    %c0_1 = arith.constant 0 : index
    %c0_2 = arith.constant 0 : index
    %1 = vector.load %arg2[%c0_1, %c0_2] : memref<32x64xf32, #tpu.memory_space<vmem>>, vector<32x64xf32>
    %c0_3 = arith.constant 0 : index
    %c0_4 = arith.constant 0 : index
    %2 = vector.load %arg3[%c0_3, %c0_4] : memref<1x64xf32, #tpu.memory_space<vmem>>, vector<1x64xf32>
    %cst = arith.constant dense<0.000000e+00> : vector<8x64xf32>
    %3 = tpu.matmul %0, %1, %cst {dimension_numbers = #tpu.dot_dimension_numbers<[1], [0], [0], [1], [0, 0, 1, 1], [], []>} : vector<8x32xf32>, vector<32x64xf32>, vector<8x64xf32> -> vector<8x64xf32>
    %4 = vector.broadcast %2 : vector<1x64xf32> to vector<8x64xf32>
    %5 = arith.addf %3, %4 : vector<8x64xf32>
    %cst_5 = arith.constant 0.000000e+00 : f32
    %6 = vector.broadcast %cst_5 : f32 to vector<8x64xf32>
    %7 = arith.maximumf %5, %6 : vector<8x64xf32>
    %c0_6 = arith.constant 0 : index
    %c0_7 = arith.constant 0 : index
    %8 = vector.load %arg4[%c0_6, %c0_7] : memref<64x32xf32, #tpu.memory_space<vmem>>, vector<64x32xf32>
    %c0_8 = arith.constant 0 : index
    %c0_9 = arith.constant 0 : index
    %9 = vector.load %arg5[%c0_8, %c0_9] : memref<1x32xf32, #tpu.memory_space<vmem>>, vector<1x32xf32>
    %cst_10 = arith.constant dense<0.000000e+00> : vector<8x32xf32>
    %10 = tpu.matmul %7, %8, %cst_10 {dimension_numbers = #tpu.dot_dimension_numbers<[1], [0], [0], [1], [0, 0, 1, 1], [], []>} : vector<8x64xf32>, vector<64x32xf32>, vector<8x32xf32> -> vector<8x32xf32>
    %11 = vector.broadcast %9 : vector<1x32xf32> to vector<8x32xf32>
    %12 = arith.addf %10, %11 : vector<8x32xf32>
    %cst_11 = arith.constant 0.000000e+00 : f32
    %13 = vector.broadcast %cst_11 : f32 to vector<8x32xf32>
    %14 = arith.maximumf %12, %13 : vector<8x32xf32>
    %c0_12 = arith.constant 0 : index
    %c0_13 = arith.constant 0 : index
    %15 = vector.load %arg6[%c0_12, %c0_13] : memref<32x16xf32, #tpu.memory_space<vmem>>, vector<32x16xf32>
    %c0_14 = arith.constant 0 : index
    %c0_15 = arith.constant 0 : index
    %16 = vector.load %arg7[%c0_14, %c0_15] : memref<1x16xf32, #tpu.memory_space<vmem>>, vector<1x16xf32>
    %cst_16 = arith.constant dense<0.000000e+00> : vector<8x16xf32>
    %17 = tpu.matmul %14, %15, %cst_16 {dimension_numbers = #tpu.dot_dimension_numbers<[1], [0], [0], [1], [0, 0, 1, 1], [], []>} : vector<8x32xf32>, vector<32x16xf32>, vector<8x16xf32> -> vector<8x16xf32>
    %18 = vector.broadcast %16 : vector<1x16xf32> to vector<8x16xf32>
    %19 = arith.addf %17, %18 : vector<8x16xf32>
    %c0_17 = arith.constant 0 : index
    %c0_18 = arith.constant 0 : index
    %20 = vector.load %arg8[%c0_17, %c0_18] : memref<8x16xf32, #tpu.memory_space<vmem>>, vector<8x16xf32>
    tpu.vector_store %arg8[%c0_17, %c0_18], %19 {strides = array<i32>} : memref<8x16xf32, #tpu.memory_space<vmem>>, vector<8x16xf32>,
    return
  }
  func.func @transform_0(%arg0: i32) -> (i32, i32) {
    %c0_i32 = arith.constant 0 : i32
    %c0_i32_0 = arith.constant 0 : i32
    return %arg0, %c0_i32 : i32, i32
  }
  func.func @transform_1(%arg0: i32) -> (i32, i32) {
    %c0_i32 = arith.constant 0 : i32
    %c0_i32_0 = arith.constant 0 : i32
    %c0_i32_1 = arith.constant 0 : i32
    return %c0_i32, %c0_i32_0 : i32, i32
  }
  func.func @transform_2(%arg0: i32) -> (i32, i32) {
    %c0_i32 = arith.constant 0 : i32
    %c0_i32_0 = arith.constant 0 : i32
    %c0_i32_1 = arith.constant 0 : i32
    return %c0_i32, %c0_i32_0 : i32, i32
  }
  func.func @transform_3(%arg0: i32) -> (i32, i32) {
    %c0_i32 = arith.constant 0 : i32
    %c0_i32_0 = arith.constant 0 : i32
    %c0_i32_1 = arith.constant 0 : i32
    return %c0_i32, %c0_i32_0 : i32, i32
  }
  func.func @transform_4(%arg0: i32) -> (i32, i32) {
    %c0_i32 = arith.constant 0 : i32
    %c0_i32_0 = arith.constant 0 : i32
    %c0_i32_1 = arith.constant 0 : i32
    return %c0_i32, %c0_i32_0 : i32, i32
  }
  func.func @transform_5(%arg0: i32) -> (i32, i32) {
    %c0_i32 = arith.constant 0 : i32
    %c0_i32_0 = arith.constant 0 : i32
    %c0_i32_1 = arith.constant 0 : i32
    return %c0_i32, %c0_i32_0 : i32, i32
  }
  func.func @transform_6(%arg0: i32) -> (i32, i32) {
    %c0_i32 = arith.constant 0 : i32
    %c0_i32_0 = arith.constant 0 : i32
    %c0_i32_1 = arith.constant 0 : i32
    return %c0_i32, %c0_i32_0 : i32, i32
  }
  func.func @transform_7(%arg0: i32) -> (i32, i32) {
    %c0_i32 = arith.constant 0 : i32
    %c0_i32_0 = arith.constant 0 : i32
    return %arg0, %c0_i32 : i32, i32
  }
}

</mosaic_0001>

<llo_original>
// kernel: encoder_forward.1
$region0: #{encoder_forward.1}
  #allocation0 [shape = 'u32[]', space=smem, size = 0x4, offset = 0x4, fixed_abs, tag = 'smem constant byte address 0x4 - core index']
  #allocation1 [shape = 'u32[144,128]{1,0:T(1,128)}', space=vmem, size = 0x12000, scoped, tag = 'internal scratch']
  %s0 = inlined_call_operand.vmem [shape: f32[8,32], index: 0, kind: input, shape index: {}]
  %s1 = inlined_call_operand.vmem [shape: f32[32,64], index: 1, kind: input, shape index: {}]
  %s2 = inlined_call_operand.vmem [shape: f32[1,64], index: 2, kind: input, shape index: {}]
  %s3 = inlined_call_operand.vmem [shape: f32[64,32], index: 3, kind: input, shape index: {}]
  %s4 = inlined_call_operand.vmem [shape: f32[1,32], index: 4, kind: input, shape index: {}]
  %s5 = inlined_call_operand.vmem [shape: f32[32,16], index: 5, kind: input, shape index: {}]
  %s6 = inlined_call_operand.vmem [shape: f32[1,16], index: 6, kind: input, shape index: {}]
  %s7 = inlined_call_operand.hbm [shape: f32[8,16], index: 7, kind: output, shape index: {}]
  %s8 = sld [smem:[#allocation0]]
  $region38: #{encoder_forward.1} parent=0
    _
  %s10 = ssub.s32 1, %s8
  %s11 = scalar_select 0, %s10, %s8
  $region1: #{encoder_forward.1} parent=0
    #allocation2 [shape = 'u8[4096]{0}', space=vmem, size = 0x1000, scoped, tag = 'output window, operand 0, single buffered']
    #allocation3 [shape = 's32[1]{0}', space=sflag, size = 0x4, scoped, tag = 'scoped memory for encoder_forward.1']
    %12 = vsyncpa [#allocation3], 0
    // Predicated region
    $region2: #{encoder_forward.1} parent=1 // pred_check
      _
    $region3: #{encoder_forward.1} parent=1 // pred_check_branch
      %14 = sbr.rel (0) target = $region5
    $region4: #{encoder_forward.1} parent=1 // pred_region
      _
    $region5: #{encoder_forward.1} parent=1 // pred_fallthru
      _
    // Predicated region
    $region6: #{encoder_forward.1} parent=1 // pred_check
      _
    $region7: #{encoder_forward.1} parent=1 // pred_check_branch
      %16 = sbr.rel (0) target = $region9
    $region8: #{encoder_forward.1} parent=1 // pred_region
      _
    $region9: #{encoder_forward.1} parent=1 // pred_fallthru
      _
    // Predicated region
    $region10: #{encoder_forward.1} parent=1 // pred_check
      _
    $region11: #{encoder_forward.1} parent=1 // pred_check_branch
      %18 = sbr.rel (0) target = $region13
    $region12: #{encoder_forward.1} parent=1 // pred_region
      _
    $region13: #{encoder_forward.1} parent=1 // pred_fallthru
      _
    // Predicated region
    $region14: #{encoder_forward.1} parent=1 // pred_check
      _
    $region15: #{encoder_forward.1} parent=1 // pred_check_branch
      %20 = sbr.rel (0) target = $region17
    $region16: #{encoder_forward.1} parent=1 // pred_region
      _
    $region17: #{encoder_forward.1} parent=1 // pred_fallthru
      _
    // Predicated region
    $region18: #{encoder_forward.1} parent=1 // pred_check
      _
    $region19: #{encoder_forward.1} parent=1 // pred_check_branch
      %22 = sbr.rel (0) target = $region21
    $region20: #{encoder_forward.1} parent=1 // pred_region
      _
    $region21: #{encoder_forward.1} parent=1 // pred_fallthru
      _
    // Predicated region
    $region22: #{encoder_forward.1} parent=1 // pred_check
      _
    $region23: #{encoder_forward.1} parent=1 // pred_check_branch
      %24 = sbr.rel (0) target = $region25
    $region24: #{encoder_forward.1} parent=1 // pred_region
      _
    $region25: #{encoder_forward.1} parent=1 // pred_fallthru
      _
    // Predicated region
    $region26: #{encoder_forward.1} parent=1 // pred_check
      _
    $region27: #{encoder_forward.1} parent=1 // pred_check_branch
      %26 = sbr.rel (0) target = $region29
    $region28: #{encoder_forward.1} parent=1 // pred_region
      _
    $region29: #{encoder_forward.1} parent=1 // pred_fallthru
      _
    %v27 = vld [vmem:[%s0] sm:$0xff]
    %v28 = vld [vmem:[%s1] sm:$0xff]
    %v29 = vld [vmem:[%s1 + $0x8] sm:$0xff]
    %v30 = vld [vmem:[%s1 + $0x10] sm:$0xff]
    %v31 = vld [vmem:[%s1 + $0x18] sm:$0xff]
    %v32 = vld [vmem:[%s2] sm:$0x1]
    %v34 = vlaneseq
    %v35 = vshrl.u32 %v34, 7
    %v36 = vsub.s32 0, %v35
    %v37 = vrot.slane %v32, %v36
    %vm39 = vcmask 261120
    %v41 = vsel %vm39, %v27, 0
    %43 = vmatprep.subr.mxu0 0.0
    %44 = vmatpush1.msra.mxu0 %v28
    %45 = vmatprep.subr.mxu0 0.0
    %46 = vmatpush1.msra.mxu0 %v29
    %47 = vmatprep.subr.mxu0 0.0
    %48 = vmatpush1.msra.mxu0 %v30
    %49 = vmatprep.subr.mxu0 0.0
    %50 = vmatpush1.msra.mxu0 %v31
    %51 = vmatprep.subr.mxu0 0.0
    %52 = vmatpush1.msra.mxu0 0.0
    %53 = vmatprep.subr.mxu0 0.0
    %54 = vmatpush1.msra.mxu0 0.0
    %55 = vmatprep.subr.mxu0 0.0
    %56 = vmatpush1.msra.mxu0 0.0
    %57 = vmatprep.subr.mxu0 0.0
    %58 = vmatpush1.msra.mxu0 0.0
    %59 = vmatprep.subr.mxu0 0.0
    %60 = vmatpush1.msra.mxu0 0.0
    %61 = vmatprep.subr.mxu0 0.0
    %62 = vmatpush1.msra.mxu0 0.0
    %63 = vmatprep.subr.mxu0 0.0
    %64 = vmatpush1.msra.mxu0 0.0
    %65 = vmatprep.subr.mxu0 0.0
    %66 = vmatpush1.msra.mxu0 0.0
    %67 = vmatprep.subr.mxu0 0.0
    %68 = vmatpush1.msra.mxu0 0.0
    %69 = vmatprep.subr.mxu0 0.0
    %70 = vmatpush1.msra.mxu0 0.0
    %71 = vmatprep.subr.mxu0 0.0
    %72 = vmatpush1.msra.mxu0 0.0
    %73 = vmatprep.subr.mxu0 0.0
    %74 = vmatpush1.msra.mxu0 0.0
    %75 = vmatprep.subr.mxu0 0.0
    %76 = vmatpush1.msra.mxu0 0.0
    %77 = vmatprep.subr.mxu0 0.0
    %78 = vmatpush1.msra.mxu0 0.0
    %79 = vmatprep.subr.mxu0 0.0
    %80 = vmatpush1.msra.mxu0 0.0
    %81 = vmatprep.subr.mxu0 0.0
    %82 = vmatpush1.msra.mxu0 0.0
    %83 = vmatprep.subr.mxu0 0.0
    %84 = vmatpush1.msra.mxu0 0.0
    %85 = vmatprep.subr.mxu0 0.0
    %86 = vmatpush1.msra.mxu0 0.0
    %87 = vmatprep.subr.mxu0 0.0
    %88 = vmatpush1.msra.mxu0 0.0
    %89 = vmatprep.subr.mxu0 0.0
    %90 = vmatpush1.msra.mxu0 0.0
    %91 = vmatprep.subr.mxu0 0.0
    %92 = vmatpush1.msra.mxu0 0.0
    %93 = vmatprep.subr.mxu0 0.0
    %94 = vmatpush1.msra.mxu0 0.0
    %95 = vmatprep.subr.mxu0 0.0
    %96 = vmatpush1.msra.mxu0 0.0
    %97 = vmatprep.subr.mxu0 0.0
    %98 = vmatpush1.msra.mxu0 0.0
    %99 = vmatprep.subr.mxu0 0.0
    %100 = vmatpush1.msra.mxu0 0.0
    %101 = vmatprep.subr.mxu0 0.0
    %102 = vmatpush1.msra.mxu0 0.0
    %103 = vmatprep.subr.mxu0 0.0
    %104 = vmatpush1.msra.mxu0 0.0
    %105 = vmatprep.subr.mxu0 0.0
    %106 = vmatpush1.msra.mxu0 0.0
    %107 = vmatprep.mubr.f32.mxu0 0.0
    %108 = vmatmul.mubr.f32.gmra.mrb[0].mxu0 %v41
    %v109 = vpop.f32.mrb[0].mxu0
    %v110 = vadd.f32 %v37, %v109
    %v111 = vpop.f32.mrb[0].mxu0
    %112 = vdwg.mxu0
    %v113 = vmax.f32 %v110, 0.0
    %v114 = vld [vmem:[%s3] sm:$0xff]
    %v115 = vld [vmem:[%s3 + $0x8] sm:$0xff]
    %v116 = vld [vmem:[%s3 + $0x10] sm:$0xff]
    %v117 = vld [vmem:[%s3 + $0x18] sm:$0xff]
    %v118 = vld [vmem:[%s3 + $0x20] sm:$0xff]
    %v119 = vld [vmem:[%s3 + $0x28] sm:$0xff]
    %v120 = vld [vmem:[%s3 + $0x30] sm:$0xff]
    %v121 = vld [vmem:[%s3 + $0x38] sm:$0xff]
    %v122 = vld [vmem:[%s4] sm:$0x1]
    %v124 = vlaneseq
    %v125 = vshrl.u32 %v124, 7
    %v126 = vsub.s32 0, %v125
    %v127 = vrot.slane %v122, %v126
    %vm129 = vcmask 523264
    %v131 = vsel %vm129, %v113, 0
    %133 = vmatprep.subr.mxu0 0.0
    %134 = vmatpush1.msra.mxu0 %v114
    %135 = vmatprep.subr.mxu0 0.0
    %136 = vmatpush1.msra.mxu0 %v115
    %137 = vmatprep.subr.mxu0 0.0
    %138 = vmatpush1.msra.mxu0 %v116
    %139 = vmatprep.subr.mxu0 0.0
    %140 = vmatpush1.msra.mxu0 %v117
    %141 = vmatprep.subr.mxu0 0.0
    %142 = vmatpush1.msra.mxu0 %v118
    %143 = vmatprep.subr.mxu0 0.0
    %144 = vmatpush1.msra.mxu0 %v119
    %145 = vmatprep.subr.mxu0 0.0
    %146 = vmatpush1.msra.mxu0 %v120
    %147 = vmatprep.subr.mxu0 0.0
    %148 = vmatpush1.msra.mxu0 %v121
    %149 = vmatprep.subr.mxu0 0.0
    %150 = vmatpush1.msra.mxu0 0.0
    %151 = vmatprep.subr.mxu0 0.0
    %152 = vmatpush1.msra.mxu0 0.0
    %153 = vmatprep.subr.mxu0 0.0
    %154 = vmatpush1.msra.mxu0 0.0
    %155 = vmatprep.subr.mxu0 0.0
    %156 = vmatpush1.msra.mxu0 0.0
    %157 = vmatprep.subr.mxu0 0.0
    %158 = vmatpush1.msra.mxu0 0.0
    %159 = vmatprep.subr.mxu0 0.0
    %160 = vmatpush1.msra.mxu0 0.0
    %161 = vmatprep.subr.mxu0 0.0
    %162 = vmatpush1.msra.mxu0 0.0
    %163 = vmatprep.subr.mxu0 0.0
    %164 = vmatpush1.msra.mxu0 0.0
    %165 = vmatprep.subr.mxu0 0.0
    %166 = vmatpush1.msra.mxu0 0.0
    %167 = vmatprep.subr.mxu0 0.0
    %168 = vmatpush1.msra.mxu0 0.0
    %169 = vmatprep.subr.mxu0 0.0
    %170 = vmatpush1.msra.mxu0 0.0
    %171 = vmatprep.subr.mxu0 0.0
    %172 = vmatpush1.msra.mxu0 0.0
    %173 = vmatprep.subr.mxu0 0.0
    %174 = vmatpush1.msra.mxu0 0.0
    %175 = vmatprep.subr.mxu0 0.0
    %176 = vmatpush1.msra.mxu0 0.0
    %177 = vmatprep.subr.mxu0 0.0
    %178 = vmatpush1.msra.mxu0 0.0
    %179 = vmatprep.subr.mxu0 0.0
    %180 = vmatpush1.msra.mxu0 0.0
    %181 = vmatprep.subr.mxu0 0.0
    %182 = vmatpush1.msra.mxu0 0.0
    %183 = vmatprep.subr.mxu0 0.0
    %184 = vmatpush1.msra.mxu0 0.0
    %185 = vmatprep.subr.mxu0 0.0
    %186 = vmatpush1.msra.mxu0 0.0
    %187 = vmatprep.subr.mxu0 0.0
    %188 = vmatpush1.msra.mxu0 0.0
    %189 = vmatprep.subr.mxu0 0.0
    %190 = vmatpush1.msra.mxu0 0.0
    %191 = vmatprep.subr.mxu0 0.0
    %192 = vmatpush1.msra.mxu0 0.0
    %193 = vmatprep.subr.mxu0 0.0
    %194 = vmatpush1.msra.mxu0 0.0
    %195 = vmatprep.subr.mxu0 0.0
    %196 = vmatpush1.msra.mxu0 0.0
    %197 = vmatprep.mubr.f32.mxu0 0.0
    %198 = vmatmul.mubr.f32.gmra.mrb[0].mxu0 %v131
    %v199 = vpop.f32.mrb[0].mxu0
    %v200 = vadd.f32 %v127, %v199
    %v201 = vpop.f32.mrb[0].mxu0
    %202 = vdwg.mxu0
    %v203 = vmax.f32 %v200, 0.0
    %v204 = vld [vmem:[%s5] sm:$0xff]
    %v205 = vld [vmem:[%s5 + $0x8] sm:$0xff]
    %v206 = vld [vmem:[%s5 + $0x10] sm:$0xff]
    %v207 = vld [vmem:[%s5 + $0x18] sm:$0xff]
    %v208 = vld [vmem:[%s6] sm:$0x1]
    %v210 = vlaneseq
    %v211 = vshrl.u32 %v210, 7
    %v212 = vsub.s32 0, %v211
    %v213 = vrot.slane %v208, %v212
    %v216 = vsel %vm39, %v203, 0
    %218 = vmatprep.subr.mxu0 0.0
    %219 = vmatpush1.msra.mxu0 %v204
    %220 = vmatprep.subr.mxu0 0.0
    %221 = vmatpush1.msra.mxu0 %v205
    %222 = vmatprep.subr.mxu0 0.0
    %223 = vmatpush1.msra.mxu0 %v206
    %224 = vmatprep.subr.mxu0 0.0
    %225 = vmatpush1.msra.mxu0 %v207
    %226 = vmatprep.subr.mxu0 0.0
    %227 = vmatpush1.msra.mxu0 0.0
    %228 = vmatprep.subr.mxu0 0.0
    %229 = vmatpush1.msra.mxu0 0.0
    %230 = vmatprep.subr.mxu0 0.0
    %231 = vmatpush1.msra.mxu0 0.0
    %232 = vmatprep.subr.mxu0 0.0
    %233 = vmatpush1.msra.mxu0 0.0
    %234 = vmatprep.subr.mxu0 0.0
    %235 = vmatpush1.msra.mxu0 0.0
    %236 = vmatprep.subr.mxu0 0.0
    %237 = vmatpush1.msra.mxu0 0.0
    %238 = vmatprep.subr.mxu0 0.0
    %239 = vmatpush1.msra.mxu0 0.0
    %240 = vmatprep.subr.mxu0 0.0
    %241 = vmatpush1.msra.mxu0 0.0
    %242 = vmatprep.subr.mxu0 0.0
    %243 = vmatpush1.msra.mxu0 0.0
    %244 = vmatprep.subr.mxu0 0.0
    %245 = vmatpush1.msra.mxu0 0.0
    %246 = vmatprep.subr.mxu0 0.0
    %247 = vmatpush1.msra.mxu0 0.0
    %248 = vmatprep.subr.mxu0 0.0
    %249 = vmatpush1.msra.mxu0 0.0
    %250 = vmatprep.subr.mxu0 0.0
    %251 = vmatpush1.msra.mxu0 0.0
    %252 = vmatprep.subr.mxu0 0.0
    %253 = vmatpush1.msra.mxu0 0.0
    %254 = vmatprep.subr.mxu0 0.0
    %255 = vmatpush1.msra.mxu0 0.0
    %256 = vmatprep.subr.mxu0 0.0
    %257 = vmatpush1.msra.mxu0 0.0
    %258 = vmatprep.subr.mxu0 0.0
    %259 = vmatpush1.msra.mxu0 0.0
    %260 = vmatprep.subr.mxu0 0.0
    %261 = vmatpush1.msra.mxu0 0.0
    %262 = vmatprep.subr.mxu0 0.0
    %263 = vmatpush1.msra.mxu0 0.0
    %264 = vmatprep.subr.mxu0 0.0
    %265 = vmatpush1.msra.mxu0 0.0
    %266 = vmatprep.subr.mxu0 0.0
    %267 = vmatpush1.msra.mxu0 0.0
    %268 = vmatprep.subr.mxu0 0.0
    %269 = vmatpush1.msra.mxu0 0.0
    %270 = vmatprep.subr.mxu0 0.0
    %271 = vmatpush1.msra.mxu0 0.0
    %272 = vmatprep.subr.mxu0 0.0
    %273 = vmatpush1.msra.mxu0 0.0
    %274 = vmatprep.subr.mxu0 0.0
    %275 = vmatpush1.msra.mxu0 0.0
    %276 = vmatprep.subr.mxu0 0.0
    %277 = vmatpush1.msra.mxu0 0.0
    %278 = vmatprep.subr.mxu0 0.0
    %279 = vmatpush1.msra.mxu0 0.0
    %280 = vmatprep.subr.mxu0 0.0
    %281 = vmatpush1.msra.mxu0 0.0
    %282 = vmatprep.mubr.f32.mxu0 0.0
    %283 = vmatmul.mubr.f32.gmra.mrb[0].mxu0 %v216
    %v284 = vpop.f32.mrb[0].mxu0
    %v285 = vadd.f32 %v213, %v284
    %v286 = vpop.f32.mrb[0].mxu0
    %287 = vdwg.mxu0
    %vm288 = vcmask 130048
    %289 = vst.msk [vmem:[#allocation2] sm:$0xff] %vm288, %v285
    // Predicated region
    $region30: #{encoder_forward.1} parent=1 // pred_check
      _
    $region31: #{encoder_forward.1} parent=1 // pred_check_branch
      %291 = sbr.rel (0) target = $region33
    $region32: #{encoder_forward.1} parent=1 // pred_region
      %s293 = ssub.s32 128, 128
      %294 = vsyncadd [#allocation3], %s293
      %s296 = sshll.u32 [#allocation2], 4
      %s297 = int_to_ptr.vmem [resolvable:$true] %s296
      %299 = dma.vmem_to_hbm [thread:$0]  %s297, 128, %s7, [#allocation3]
    $region33: #{encoder_forward.1} parent=1 // pred_fallthru
      _
    // Predicated region
    $region34: #{encoder_forward.1} parent=1 // pred_check
      _
    $region35: #{encoder_forward.1} parent=1 // pred_check_branch
      %301 = sbr.rel (0) target = $region37
    $region36: #{encoder_forward.1} parent=1 // pred_region
      %302 = dma.done [#allocation3], 128
    $region37: #{encoder_forward.1} parent=1 // pred_fallthru
      _
    %303 = vsyncpa [#allocation3], 1

// kernel: encoder_forward.1
$region0: #{encoder_forward.1}
  #allocation0 [shape = 'u32[]', space=smem, size = 0x4, offset = 0x4, fixed_abs, tag = 'smem constant byte address 0x4 - core index']
  #allocation1 [shape = 'u32[144,128]{1,0:T(1,128)}', space=vmem, size = 0x12000, scoped, tag = 'internal scratch']
  %s0 = inlined_call_operand.vmem [shape: f32[8,32], index: 0, kind: input, shape index: {}]
  %s1 = inlined_call_operand.vmem [shape: f32[32,64], index: 1, kind: input, shape index: {}]
  %s2 = inlined_call_operand.vmem [shape: f32[1,64], index: 2, kind: input, shape index: {}]
  %s3 = inlined_call_operand.vmem [shape: f32[64,32], index: 3, kind: input, shape index: {}]
  %s4 = inlined_call_operand.vmem [shape: f32[1,32], index: 4, kind: input, shape index: {}]
  %s5 = inlined_call_operand.vmem [shape: f32[32,16], index: 5, kind: input, shape index: {}]
  %s6 = inlined_call_operand.vmem [shape: f32[1,16], index: 6, kind: input, shape index: {}]
  %s7 = inlined_call_operand.hbm [shape: f32[8,16], index: 7, kind: output, shape index: {}]
  %s8 = sld [smem:[#allocation0]]
  $region38: #{encoder_forward.1} parent=0
    _
  %s10 = ssub.s32 1, %s8
  %s11 = scalar_select 0, %s10, %s8
  $region1: #{encoder_forward.1} parent=0
    #allocation2 [shape = 'u8[4096]{0}', space=vmem, size = 0x1000, scoped, tag = 'output window, operand 0, single buffered']
    #allocation3 [shape = 's32[1]{0}', space=sflag, size = 0x4, scoped, tag = 'scoped memory for encoder_forward.1']
    %12 = vsyncpa [#allocation3], 0
    // Predicated region
    $region2: #{encoder_forward.1} parent=1 // pred_check
      _
    $region3: #{encoder_forward.1} parent=1 // pred_check_branch
      %14 = sbr.rel (0) target = $region5
    $region4: #{encoder_forward.1} parent=1 // pred_region
      _
    $region5: #{encoder_forward.1} parent=1 // pred_fallthru
      _
    // Predicated region
    $region6: #{encoder_forward.1} parent=1 // pred_check
      _
    $region7: #{encoder_forward.1} parent=1 // pred_check_branch
      %16 = sbr.rel (0) target = $region9
    $region8: #{encoder_forward.1} parent=1 // pred_region
      _
    $region9: #{encoder_forward.1} parent=1 // pred_fallthru
      _
    // Predicated region
    $region10: #{encoder_forward.1} parent=1 // pred_check
      _
    $region11: #{encoder_forward.1} parent=1 // pred_check_branch
      %18 = sbr.rel (0) target = $region13
    $region12: #{encoder_forward.1} parent=1 // pred_region
      _
    $region13: #{encoder_forward.1} parent=1 // pred_fallthru
      _
    // Predicated region
    $region14: #{encoder_forward.1} parent=1 // pred_check
      _
    $region15: #{encoder_forward.1} parent=1 // pred_check_branch
      %20 = sbr.rel (0) target = $region17
    $region16: #{encoder_forward.1} parent=1 // pred_region
      _
    $region17: #{encoder_forward.1} parent=1 // pred_fallthru
      _
    // Predicated region
    $region18: #{encoder_forward.1} parent=1 // pred_check
      _
    $region19: #{encoder_forward.1} parent=1 // pred_check_branch
      %22 = sbr.rel (0) target = $region21
    $region20: #{encoder_forward.1} parent=1 // pred_region
      _
    $region21: #{encoder_forward.1} parent=1 // pred_fallthru
      _
    // Predicated region
    $region22: #{encoder_forward.1} parent=1 // pred_check
      _
    $region23: #{encoder_forward.1} parent=1 // pred_check_branch
      %24 = sbr.rel (0) target = $region25
    $region24: #{encoder_forward.1} parent=1 // pred_region
      _
    $region25: #{encoder_forward.1} parent=1 // pred_fallthru
      _
    // Predicated region
    $region26: #{encoder_forward.1} parent=1 // pred_check
      _
    $region27: #{encoder_forward.1} parent=1 // pred_check_branch
      %26 = sbr.rel (0) target = $region29
    $region28: #{encoder_forward.1} parent=1 // pred_region
      _
    $region29: #{encoder_forward.1} parent=1 // pred_fallthru
      _
    %v27 = vld [vmem:[%s0] sm:$0xff]
    %v28 = vld [vmem:[%s1] sm:$0xff]
    %v29 = vld [vmem:[%s1 + $0x8] sm:$0xff]
    %v30 = vld [vmem:[%s1 + $0x10] sm:$0xff]
    %v31 = vld [vmem:[%s1 + $0x18] sm:$0xff]
    %v32 = vld [vmem:[%s2] sm:$0x1]
    %v34 = vlaneseq
    %v35 = vshrl.u32 %v34, 7
    %v36 = vsub.s32 0, %v35
    %v37 = vrot.slane %v32, %v36
    %vm39 = vcmask 261120
    %v41 = vsel %vm39, %v27, 0
    %43 = vmatprep.subr.mxu0 0.0
    %44 = vmatpush1.msra.mxu0 %v28
    %45 = vmatprep.subr.mxu0 0.0
    %46 = vmatpush1.msra.mxu0 %v29
    %47 = vmatprep.subr.mxu0 0.0
    %48 = vmatpush1.msra.mxu0 %v30
    %49 = vmatprep.subr.mxu0 0.0
    %50 = vmatpush1.msra.mxu0 %v31
    %51 = vmatprep.subr.mxu0 0.0
    %52 = vmatpush1.msra.mxu0 0.0
    %53 = vmatprep.subr.mxu0 0.0
    %54 = vmatpush1.msra.mxu0 0.0
    %55 = vmatprep.subr.mxu0 0.0
    %56 = vmatpush1.msra.mxu0 0.0
    %57 = vmatprep.subr.mxu0 0.0
    %58 = vmatpush1.msra.mxu0 0.0
    %59 = vmatprep.subr.mxu0 0.0
    %60 = vmatpush1.msra.mxu0 0.0
    %61 = vmatprep.subr.mxu0 0.0
    %62 = vmatpush1.msra.mxu0 0.0
    %63 = vmatprep.subr.mxu0 0.0
    %64 = vmatpush1.msra.mxu0 0.0
    %65 = vmatprep.subr.mxu0 0.0
    %66 = vmatpush1.msra.mxu0 0.0
    %67 = vmatprep.subr.mxu0 0.0
    %68 = vmatpush1.msra.mxu0 0.0
    %69 = vmatprep.subr.mxu0 0.0
    %70 = vmatpush1.msra.mxu0 0.0
    %71 = vmatprep.subr.mxu0 0.0
    %72 = vmatpush1.msra.mxu0 0.0
    %73 = vmatprep.subr.mxu0 0.0
    %74 = vmatpush1.msra.mxu0 0.0
    %75 = vmatprep.subr.mxu0 0.0
    %76 = vmatpush1.msra.mxu0 0.0
    %77 = vmatprep.subr.mxu0 0.0
    %78 = vmatpush1.msra.mxu0 0.0
    %79 = vmatprep.subr.mxu0 0.0
    %80 = vmatpush1.msra.mxu0 0.0
    %81 = vmatprep.subr.mxu0 0.0
    %82 = vmatpush1.msra.mxu0 0.0
    %83 = vmatprep.subr.mxu0 0.0
    %84 = vmatpush1.msra.mxu0 0.0
    %85 = vmatprep.subr.mxu0 0.0
    %86 = vmatpush1.msra.mxu0 0.0
    %87 = vmatprep.subr.mxu0 0.0
    %88 = vmatpush1.msra.mxu0 0.0
    %89 = vmatprep.subr.mxu0 0.0
    %90 = vmatpush1.msra.mxu0 0.0
    %91 = vmatprep.subr.mxu0 0.0
    %92 = vmatpush1.msra.mxu0 0.0
    %93 = vmatprep.subr.mxu0 0.0
    %94 = vmatpush1.msra.mxu0 0.0
    %95 = vmatprep.subr.mxu0 0.0
    %96 = vmatpush1.msra.mxu0 0.0
    %97 = vmatprep.subr.mxu0 0.0
    %98 = vmatpush1.msra.mxu0 0.0
    %99 = vmatprep.subr.mxu0 0.0
    %100 = vmatpush1.msra.mxu0 0.0
    %101 = vmatprep.subr.mxu0 0.0
    %102 = vmatpush1.msra.mxu0 0.0
    %103 = vmatprep.subr.mxu0 0.0
    %104 = vmatpush1.msra.mxu0 0.0
    %105 = vmatprep.subr.mxu0 0.0
    %106 = vmatpush1.msra.mxu0 0.0
    %107 = vmatprep.mubr.f32.mxu0 0.0
    %108 = vmatmul.mubr.f32.gmra.mrb[0].mxu0 %v41
    %v109 = vpop.f32.mrb[0].mxu0
    %v110 = vadd.f32 %v37, %v109
    %v111 = vpop.f32.mrb[0].mxu0
    %112 = vdwg.mxu0
    %v113 = vmax.f32 %v110, 0.0
    %v114 = vld [vmem:[%s3] sm:$0xff]
    %v115 = vld [vmem:[%s3 + $0x8] sm:$0xff]
    %v116 = vld [vmem:[%s3 + $0x10] sm:$0xff]
    %v117 = vld [vmem:[%s3 + $0x18] sm:$0xff]
    %v118 = vld [vmem:[%s3 + $0x20] sm:$0xff]
    %v119 = vld [vmem:[%s3 + $0x28] sm:$0xff]
    %v120 = vld [vmem:[%s3 + $0x30] sm:$0xff]
    %v121 = vld [vmem:[%s3 + $0x38] sm:$0xff]
    %v122 = vld [vmem:[%s4] sm:$0x1]
    %v124 = vlaneseq
    %v125 = vshrl.u32 %v124, 7
    %v126 = vsub.s32 0, %v125
    %v127 = vrot.slane %v122, %v126
    %vm129 = vcmask 523264
    %v131 = vsel %vm129, %v113, 0
    %133 = vmatprep.subr.mxu0 0.0
    %134 = vmatpush1.msra.mxu0 %v114
    %135 = vmatprep.subr.mxu0 0.0
    %136 = vmatpush1.msra.mxu0 %v115
    %137 = vmatprep.subr.mxu0 0.0
    %138 = vmatpush1.msra.mxu0 %v116
    %139 = vmatprep.subr.mxu0 0.0
    %140 = vmatpush1.msra.mxu0 %v117
    %141 = vmatprep.subr.mxu0 0.0
    %142 = vmatpush1.msra.mxu0 %v118
    %143 = vmatprep.subr.mxu0 0.0
    %144 = vmatpush1.msra.mxu0 %v119
    %145 = vmatprep.subr.mxu0 0.0
    %146 = vmatpush1.msra.mxu0 %v120
    %147 = vmatprep.subr.mxu0 0.0
    %148 = vmatpush1.msra.mxu0 %v121
    %149 = vmatprep.subr.mxu0 0.0
    %150 = vmatpush1.msra.mxu0 0.0
    %151 = vmatprep.subr.mxu0 0.0
    %152 = vmatpush1.msra.mxu0 0.0
    %153 = vmatprep.subr.mxu0 0.0
    %154 = vmatpush1.msra.mxu0 0.0
    %155 = vmatprep.subr.mxu0 0.0
    %156 = vmatpush1.msra.mxu0 0.0
    %157 = vmatprep.subr.mxu0 0.0
    %158 = vmatpush1.msra.mxu0 0.0
    %159 = vmatprep.subr.mxu0 0.0
    %160 = vmatpush1.msra.mxu0 0.0
    %161 = vmatprep.subr.mxu0 0.0
    %162 = vmatpush1.msra.mxu0 0.0
    %163 = vmatprep.subr.mxu0 0.0
    %164 = vmatpush1.msra.mxu0 0.0
    %165 = vmatprep.subr.mxu0 0.0
    %166 = vmatpush1.msra.mxu0 0.0
    %167 = vmatprep.subr.mxu0 0.0
    %168 = vmatpush1.msra.mxu0 0.0
    %169 = vmatprep.subr.mxu0 0.0
    %170 = vmatpush1.msra.mxu0 0.0
    %171 = vmatprep.subr.mxu0 0.0
    %172 = vmatpush1.msra.mxu0 0.0
    %173 = vmatprep.subr.mxu0 0.0
    %174 = vmatpush1.msra.mxu0 0.0
    %175 = vmatprep.subr.mxu0 0.0
    %176 = vmatpush1.msra.mxu0 0.0
    %177 = vmatprep.subr.mxu0 0.0
    %178 = vmatpush1.msra.mxu0 0.0
    %179 = vmatprep.subr.mxu0 0.0
    %180 = vmatpush1.msra.mxu0 0.0
    %181 = vmatprep.subr.mxu0 0.0
    %182 = vmatpush1.msra.mxu0 0.0
    %183 = vmatprep.subr.mxu0 0.0
    %184 = vmatpush1.msra.mxu0 0.0
    %185 = vmatprep.subr.mxu0 0.0
    %186 = vmatpush1.msra.mxu0 0.0
    %187 = vmatprep.subr.mxu0 0.0
    %188 = vmatpush1.msra.mxu0 0.0
    %189 = vmatprep.subr.mxu0 0.0
    %190 = vmatpush1.msra.mxu0 0.0
    %191 = vmatprep.subr.mxu0 0.0
    %192 = vmatpush1.msra.mxu0 0.0
    %193 = vmatprep.subr.mxu0 0.0
    %194 = vmatpush1.msra.mxu0 0.0
    %195 = vmatprep.subr.mxu0 0.0
    %196 = vmatpush1.msra.mxu0 0.0
    %197 = vmatprep.mubr.f32.mxu0 0.0
    %198 = vmatmul.mubr.f32.gmra.mrb[0].mxu0 %v131
    %v199 = vpop.f32.mrb[0].mxu0
    %v200 = vadd.f32 %v127, %v199
    %v201 = vpop.f32.mrb[0].mxu0
    %202 = vdwg.mxu0
    %v203 = vmax.f32 %v200, 0.0
    %v204 = vld [vmem:[%s5] sm:$0xff]
    %v205 = vld [vmem:[%s5 + $0x8] sm:$0xff]
    %v206 = vld [vmem:[%s5 + $0x10] sm:$0xff]
    %v207 = vld [vmem:[%s5 + $0x18] sm:$0xff]
    %v208 = vld [vmem:[%s6] sm:$0x1]
    %v210 = vlaneseq
    %v211 = vshrl.u32 %v210, 7
    %v212 = vsub.s32 0, %v211
    %v213 = vrot.slane %v208, %v212
    %v216 = vsel %vm39, %v203, 0
    %218 = vmatprep.subr.mxu0 0.0
    %219 = vmatpush1.msra.mxu0 %v204
    %220 = vmatprep.subr.mxu0 0.0
    %221 = vmatpush1.msra.mxu0 %v205
    %222 = vmatprep.subr.mxu0 0.0
    %223 = vmatpush1.msra.mxu0 %v206
    %224 = vmatprep.subr.mxu0 0.0
    %225 = vmatpush1.msra.mxu0 %v207
    %226 = vmatprep.subr.mxu0 0.0
    %227 = vmatpush1.msra.mxu0 0.0
    %228 = vmatprep.subr.mxu0 0.0
    %229 = vmatpush1.msra.mxu0 0.0
    %230 = vmatprep.subr.mxu0 0.0
    %231 = vmatpush1.msra.mxu0 0.0
    %232 = vmatprep.subr.mxu0 0.0
    %233 = vmatpush1.msra.mxu0 0.0
    %234 = vmatprep.subr.mxu0 0.0
    %235 = vmatpush1.msra.mxu0 0.0
    %236 = vmatprep.subr.mxu0 0.0
    %237 = vmatpush1.msra.mxu0 0.0
    %238 = vmatprep.subr.mxu0 0.0
    %239 = vmatpush1.msra.mxu0 0.0
    %240 = vmatprep.subr.mxu0 0.0
    %241 = vmatpush1.msra.mxu0 0.0
    %242 = vmatprep.subr.mxu0 0.0
    %243 = vmatpush1.msra.mxu0 0.0
    %244 = vmatprep.subr.mxu0 0.0
    %245 = vmatpush1.msra.mxu0 0.0
    %246 = vmatprep.subr.mxu0 0.0
    %247 = vmatpush1.msra.mxu0 0.0
    %248 = vmatprep.subr.mxu0 0.0
    %249 = vmatpush1.msra.mxu0 0.0
    %250 = vmatprep.subr.mxu0 0.0
    %251 = vmatpush1.msra.mxu0 0.0
    %252 = vmatprep.subr.mxu0 0.0
    %253 = vmatpush1.msra.mxu0 0.0
    %254 = vmatprep.subr.mxu0 0.0
    %255 = vmatpush1.msra.mxu0 0.0
    %256 = vmatprep.subr.mxu0 0.0
    %257 = vmatpush1.msra.mxu0 0.0
    %258 = vmatprep.subr.mxu0 0.0
    %259 = vmatpush1.msra.mxu0 0.0
    %260 = vmatprep.subr.mxu0 0.0
    %261 = vmatpush1.msra.mxu0 0.0
    %262 = vmatprep.subr.mxu0 0.0
    %263 = vmatpush1.msra.mxu0 0.0
    %264 = vmatprep.subr.mxu0 0.0
    %265 = vmatpush1.msra.mxu0 0.0
    %266 = vmatprep.subr.mxu0 0.0
    %267 = vmatpush1.msra.mxu0 0.0
    %268 = vmatprep.subr.mxu0 0.0
    %269 = vmatpush1.msra.mxu0 0.0
    %270 = vmatprep.subr.mxu0 0.0
    %271 = vmatpush1.msra.mxu0 0.0
    %272 = vmatprep.subr.mxu0 0.0
    %273 = vmatpush1.msra.mxu0 0.0
    %274 = vmatprep.subr.mxu0 0.0
    %275 = vmatpush1.msra.mxu0 0.0
    %276 = vmatprep.subr.mxu0 0.0
    %277 = vmatpush1.msra.mxu0 0.0
    %278 = vmatprep.subr.mxu0 0.0
    %279 = vmatpush1.msra.mxu0 0.0
    %280 = vmatprep.subr.mxu0 0.0
    %281 = vmatpush1.msra.mxu0 0.0
    %282 = vmatprep.mubr.f32.mxu0 0.0
    %283 = vmatmul.mubr.f32.gmra.mrb[0].mxu0 %v216
    %v284 = vpop.f32.mrb[0].mxu0
    %v285 = vadd.f32 %v213, %v284
    %v286 = vpop.f32.mrb[0].mxu0
    %287 = vdwg.mxu0
    %vm288 = vcmask 130048
    %289 = vst.msk [vmem:[#allocation2] sm:$0xff] %vm288, %v285
    // Predicated region
    $region30: #{encoder_forward.1} parent=1 // pred_check
      _
    $region31: #{encoder_forward.1} parent=1 // pred_check_branch
      %291 = sbr.rel (0) target = $region33
    $region32: #{encoder_forward.1} parent=1 // pred_region
      %s293 = ssub.s32 128, 128
      %294 = vsyncadd [#allocation3], %s293
      %s296 = sshll.u32 [#allocation2], 4
      %s297 = int_to_ptr.vmem [resolvable:$true] %s296
      %299 = dma.vmem_to_hbm [thread:$0]  %s297, 128, %s7, [#allocation3]
    $region33: #{encoder_forward.1} parent=1 // pred_fallthru
      _
    // Predicated region
    $region34: #{encoder_forward.1} parent=1 // pred_check
      _
    $region35: #{encoder_forward.1} parent=1 // pred_check_branch
      %301 = sbr.rel (0) target = $region37
    $region36: #{encoder_forward.1} parent=1 // pred_region
      %302 = dma.done [#allocation3], 128
    $region37: #{encoder_forward.1} parent=1 // pred_fallthru
      _
    %303 = vsyncpa [#allocation3], 1

</llo_original>
